<compile_context>
chip_gen: v6e
topology: v6e:2x2x1
jax: 0.10.0
libtpu: 0.0.40
codegen_flags: <defaults>
</compile_context>

<pallas_src>
import functools

import jax
import jax.numpy as jnp
from jax import lax
from jax.experimental import pallas as pl
from jax.experimental.pallas import tpu as pltpu


def _pair(v):
    if isinstance(v, (tuple, list)):
        return int(v[0]), int(v[1])
    return int(v), int(v)


def _pool_identity(dtype):
    dtype = jnp.dtype(dtype)
    if jnp.issubdtype(dtype, jnp.floating):
        return float("-inf")
    return int(jnp.iinfo(dtype).min)


def _round_up(v, m):
    return -(-v // m) * m


def _vmem_capacity_bytes():
    try:
        info = pltpu.get_tpu_info()
        cap = getattr(info, "vmem_capacity_bytes", None)
        if cap:
            return int(cap)
    except Exception:
        pass
    return 128 * 1024 * 1024


def _maxpool2d_kernel(*refs, kh, kw, sh, sw, th_out, wo, th_blk, halo):
    """Pool one channels-last block (rows, W_total, TB) -> (th_out, Wo, TB)."""
    if halo:
        # Assemble main block + halo rows in a VMEM scratch buffer (ref slice
        # stores only; no concatenate needed).
        x_ref, halo_ref, o_ref, asm_ref = refs
        asm_ref[pl.ds(0, th_blk), :, :] = x_ref[...]
        asm_ref[pl.ds(th_blk, halo), :, :] = halo_ref[...]
        x = asm_ref[...]
    else:
        x_ref, o_ref = refs
        x = x_ref[...]

    rows, w_total, tb = x.shape
    hq = rows // sh
    wq = w_total // sw

    # H stage: running max over the kh window-row offsets.  Each phase slice is
    # a leading-axis select (cheap vreg-row moves), so no large temporaries.
    xg = x.reshape(hq, sh, w_total, tb)
    z = None
    for di in range(kh):
        q, r = divmod(di, sh)
        sl = xg[q:q + th_out, r]                       # (th_out, W_total, TB)
        z = sl if z is None else jnp.maximum(z, sl)

    # W stage on the (1/sh)-sized intermediate: phase decomposition over the kw
    # window-column offsets — sublane-axis work only, never the lane axis.
    zg = z.reshape(th_out, wq, sw, tb)
    out = None
    for dj in range(kw):
        qw, rw = divmod(dj, sw)
        sl = zg[:, qw:qw + wo, rw]                     # (th_out, Wo, TB)
        out = sl if out is None else jnp.maximum(out, sl)

    o_ref[...] = out


def maxpool2d_pallas(x, kernel_size=2, stride=None, padding=0):
    """Equivalent of TransLayer_rule3_MaxPool2d(nn.MaxPool2d(k, s, p))(x).

    x: (N, C, H, W).  dilation=1 (forced by the rule3 conversion),
    ceil_mode=False (PyTorch default).
    """
    # TODO(synk): ceil_mode=True is not implemented (module default is False).
    N, C, H, W = x.shape
    kh, kw = _pair(kernel_size)
    if stride is None:
        stride = kernel_size
    sh, sw = _pair(stride)
    ph, pw = _pair(padding)

    Ho = (H + 2 * ph - kh) // sh + 1
    Wo = (W + 2 * pw - kw) // sw + 1
    B = N * C
    esize = jnp.dtype(x.dtype).itemsize
    ident = _pool_identity(x.dtype)

    # ---- window decomposition constants -----------------------------------
    qh = (kh - 1) // sh            # extra H stride-groups beyond TH_out
    qw_extra = (kw - 1) // sw      # extra W stride-groups beyond Wo
    halo = qh * sh                 # halo rows appended below each main H block
    q_step = max(1, qh)

    # ---- padded W extent (multiple of sw, holds every read column) --------
    Wq = max(Wo + qw_extra, pl.cdiv(W + pw, sw))
    W_total = Wq * sw

    # ---- per-generation VMEM budget ----------------------------------------
    vmem_cap = _vmem_capacity_bytes()
    budget = int(0.85 * vmem_cap)
    target_in_block = (8 << 20) if vmem_cap >= (96 << 20) else (4 << 20)

    # ---- lane (N*C) tiling --------------------------------------------------
    row_group_bytes = sh * W_total * esize          # one output-row group/lane
    lane_quota = max(1, target_in_block // max(1, row_group_bytes))
    if B <= 128:
        TB, nb = B, 1
    else:
        tb_cap = min(2048, max(128, (lane_quota // 128) * 128))
        if _round_up(B, 128) <= tb_cap:
            TB, nb = B, 1                           # whole axis, no overread
        else:
            TB = tb_cap
            nb = pl.cdiv(B, TB)
            TB = _round_up(pl.cdiv(B, nb), 128)     # rebalance, minimize waste
            nb = pl.cdiv(B, TB)
    B_pad = B if nb == 1 else nb * TB

    # ---- H tiling (output rows per grid step) -------------------------------
    th_fit = max(1, target_in_block // max(1, sh * W_total * TB * esize))
    TH_out = _round_up(min(Ho, th_fit), q_step)
    if pl.cdiv(Ho, TH_out) == 1 and Ho >= 2:
        # Split >= 2 ways so dual-TensorCore chips (v7x) both get work.
        TH_out = _round_up(pl.cdiv(Ho, 2), q_step)

    def footprint(th_out, tb):
        th_blk_ = th_out * sh
        in_b = th_blk_ * W_total * tb * esize
        halo_b = halo * W_total * tb * esize
        out_b = th_out * Wo * tb * esize
        asm_b = (in_b + halo_b) if halo else 0
        temps = 2 * (in_b + halo_b) + 2 * ((in_b + halo_b) // sh) + 2 * out_b
        return 2 * (in_b + halo_b) + 2 * out_b + asm_b + temps + (1 << 20)

    for _ in range(16):
        if footprint(TH_out, TB) <= budget:
            break
        if TH_out > q_step:
            TH_out = max(q_step, _round_up(TH_out // 2, q_step))
        elif B > 128 and TB > 128:
            TB = max(128, ((TB // 2) // 128) * 128)
            nb = pl.cdiv(B, TB)
            TB = _round_up(pl.cdiv(B, nb), 128)
            nb = pl.cdiv(B, TB)
            B_pad = nb * TB
        else:
            break
    nh = pl.cdiv(Ho, TH_out)
    TH_blk = TH_out * sh
    vmem_limit = int(min(budget, max(footprint(TH_out, TB), 32 << 20)))

    # ---- padded H extent (covers the deepest read row) ----------------------
    H_total = max(nh * TH_blk + halo, H + ph)

    # Single XLA relayout pass: NCHW -> (H, W, N*C), padded with the pooling
    # identity so padded cells can never win the max.
    xt = jnp.transpose(x.reshape(B, H, W), (1, 2, 0))
    xt = jnp.pad(
        xt,
        ((ph, H_total - H - ph), (pw, W_total - W - pw), (0, B_pad - B)),
        constant_values=ident,
    )

    kern = functools.partial(
        _maxpool2d_kernel,
        kh=kh, kw=kw, sh=sh, sw=sw,
        th_out=TH_out, wo=Wo, th_blk=TH_blk, halo=halo,
    )

    in_specs = [pl.BlockSpec((TH_blk, W_total, TB), lambda b, h: (h, 0, b))]
    inputs = [xt]
    scratch_shapes = []
    if halo:
        halo_stride = TH_out // q_step          # TH_blk == halo * halo_stride
        in_specs.append(
            pl.BlockSpec((halo, W_total, TB),
                         lambda b, h: ((h + 1) * halo_stride, 0, b)))
        inputs.append(xt)
        scratch_shapes.append(
            pltpu.VMEM((TH_blk + halo, W_total, TB), x.dtype))

    out_padded = pl.pallas_call(
        kern,
        out_shape=jax.ShapeDtypeStruct((nh * TH_out, Wo, B_pad), x.dtype),
        grid=(nb, nh),
        in_specs=in_specs,
        out_specs=pl.BlockSpec((TH_out, Wo, TB), lambda b, h: (h, 0, b)),
        scratch_shapes=scratch_shapes,
        compiler_params=pltpu.CompilerParams(
            dimension_semantics=("parallel", "parallel"),
            vmem_limit_bytes=vmem_limit,
        ),
        cost_estimate=pl.CostEstimate(
            flops=kh * kw * Ho * Wo * B,
            transcendentals=0,
            bytes_accessed=(nh * (TH_blk + halo) * W_total * B_pad
                            + nh * TH_out * Wo * B_pad) * esize,
        ),
    )(*inputs)

    out = out_padded[:Ho, :, :B]                 # drop rounding / lane pads
    return jnp.transpose(out, (2, 0, 1)).reshape(N, C, Ho, Wo)


def _reference_maxpool2d(x, kernel_size=2, stride=None, padding=0):
    """Pure-JAX reference (lax.reduce_window) for correctness checking."""
    kh, kw = _pair(kernel_size)
    if stride is None:
        stride = kernel_size
    sh, sw = _pair(stride)
    ph, pw = _pair(padding)
    ident = _pool_identity(x.dtype)
    return lax.reduce_window(
        x,
        jnp.array(ident, x.dtype),
        lax.max,
        window_dimensions=(1, 1, kh, kw),
        window_strides=(1, 1, sh, sw),
        padding=((0, 0), (0, 0), (ph, ph), (pw, pw)),
    )


if __name__ == "__main__":
    key = jax.random.PRNGKey(0)
    # Small NCHW input consistent with MaxPool2d on a feature map.
    x = jax.random.normal(key, (2, 4, 16, 16), dtype=jnp.float32)

    cases = [
        dict(kernel_size=2, stride=2, padding=0),   # non-overlapping fast case
        dict(kernel_size=3, stride=2, padding=1),   # ResNet-stem: halo-tiled H
        dict(kernel_size=3, stride=1, padding=1),   # stride-1, 2-row halo
    ]
    for cfg in cases:
        out = jax.block_until_ready(maxpool2d_pallas(x, **cfg))
        ref = _reference_maxpool2d(x, **cfg)
        assert out.shape == ref.shape, (cfg, out.shape, ref.shape)
        assert out.dtype == x.dtype, (cfg, out.dtype)
        assert jnp.array_equal(out, ref), f"Pallas maxpool mismatch for {cfg}"

    print("KERNEL_OK")
</pallas_src>

<mosaic_0001>
module attributes {stable_mosaic.version = 11 : i64} {
  func.func @_maxpool2d_kernel(%arg0: i32, %arg1: i32, %arg2: memref<8x16x8xf32, #tpu.memory_space<vmem>>, %arg3: memref<4x8x8xf32, #tpu.memory_space<vmem>>) attributes {dimension_semantics = [#tpu.dimension_semantics<parallel>, #tpu.dimension_semantics<parallel>], iteration_bounds = array<i64: 1, 2>, scalar_prefetch = 0 : i64, scratch_operands = 0 : i64, tpu.core_type = #tpu.core_type<tc>, window_params = [{transform_indices = @transform_0, window_bounds = array<i64: 8, 16, 8>}, {transform_indices = @transform_1, window_bounds = array<i64: 4, 8, 8>}]} {
    %c0 = arith.constant 0 : index
    %c0_0 = arith.constant 0 : index
    %c0_1 = arith.constant 0 : index
    %0 = vector.load %arg2[%c0, %c0_0, %c0_1] : memref<8x16x8xf32, #tpu.memory_space<vmem>>, vector<8x16x8xf32>
    %1 = vector.shape_cast %0 : vector<8x16x8xf32> to vector<4x2x16x8xf32>
    %2 = vector.extract_strided_slice %1 {offsets = [0, 0, 0, 0], sizes = [4, 1, 16, 8], strides = [1, 1, 1, 1]} : vector<4x2x16x8xf32> to vector<4x1x16x8xf32>
    %3 = vector.shape_cast %2 : vector<4x1x16x8xf32> to vector<4x16x8xf32>
    %4 = vector.extract_strided_slice %1 {offsets = [0, 1, 0, 0], sizes = [4, 1, 16, 8], strides = [1, 1, 1, 1]} : vector<4x2x16x8xf32> to vector<4x1x16x8xf32>
    %5 = vector.shape_cast %4 : vector<4x1x16x8xf32> to vector<4x16x8xf32>
    %6 = arith.maximumf %3, %5 : vector<4x16x8xf32>
    %7 = vector.shape_cast %6 : vector<4x16x8xf32> to vector<4x8x2x8xf32>
    %8 = vector.extract_strided_slice %7 {offsets = [0, 0, 0, 0], sizes = [4, 8, 1, 8], strides = [1, 1, 1, 1]} : vector<4x8x2x8xf32> to vector<4x8x1x8xf32>
    %9 = vector.shape_cast %8 : vector<4x8x1x8xf32> to vector<4x8x8xf32>
    %10 = vector.extract_strided_slice %7 {offsets = [0, 0, 1, 0], sizes = [4, 8, 1, 8], strides = [1, 1, 1, 1]} : vector<4x8x2x8xf32> to vector<4x8x1x8xf32>
    %11 = vector.shape_cast %10 : vector<4x8x1x8xf32> to vector<4x8x8xf32>
    %12 = arith.maximumf %9, %11 : vector<4x8x8xf32>
    %c0_2 = arith.constant 0 : index
    %c0_3 = arith.constant 0 : index
    %c0_4 = arith.constant 0 : index
    %13 = vector.load %arg3[%c0_2, %c0_3, %c0_4] : memref<4x8x8xf32, #tpu.memory_space<vmem>>, vector<4x8x8xf32>
    tpu.vector_store %arg3[%c0_2, %c0_3, %c0_4], %12 {strides = array<i32>} : memref<4x8x8xf32, #tpu.memory_space<vmem>>, vector<4x8x8xf32>,
    return
  }
  func.func @transform_0(%arg0: i32, %arg1: i32) -> (i32, i32, i32) {
    %c0_i32 = arith.constant 0 : i32
    %c0_i32_0 = arith.constant 0 : i32
    return %arg1, %c0_i32, %arg0 : i32, i32, i32
  }
  func.func @transform_1(%arg0: i32, %arg1: i32) -> (i32, i32, i32) {
    %c0_i32 = arith.constant 0 : i32
    %c0_i32_0 = arith.constant 0 : i32
    return %arg1, %c0_i32, %arg0 : i32, i32, i32
  }
}

</mosaic_0001>

<llo_original>
// kernel: tpu_custom_call.1
$region0: #{tpu_custom_call.1}
  #allocation0 [shape = 'u32[]', space=smem, size = 0x4, offset = 0x4, fixed_abs, tag = 'smem constant byte address 0x4 - core index']
  #allocation1 [shape = 'u32[144,128]{1,0:T(1,128)}', space=vmem, size = 0x12000, scoped, tag = 'internal scratch']
  %s0 = inlined_call_operand.vmem [shape: f32[16,16,8], index: 0, kind: input, shape index: {}]
  %s1 = inlined_call_operand.hbm [shape: f32[8,8,8], index: 1, kind: output, shape index: {}]
  %s2 = sld [smem:[#allocation0]]
  $region37: #{tpu_custom_call.1} parent=0
    _
  %s4 = ssub.s32 1, %s2
  %s5 = scalar_select 0, %s4, %s2
  $region1: #{tpu_custom_call.1} parent=0
    #allocation2 [shape = 'u8[32768]{0}', space=vmem, size = 0x8000, scoped, tag = 'output window, operand 0']
    #allocation3 [shape = 's32[2]{0}', space=sflag, size = 0x8, scoped, tag = 'scoped memory for tpu_custom_call.1']
    %6 = vsyncpa [#allocation3], 0
    %s7 = scalar_lea.sflag [#allocation3], 1
    %8 = vsyncpa %s7, 0
    loop: start=0, step=1, limit=4
    $region2: #{tpu_custom_call.1} parent=1 // loop_pre_header
      _
    $region3: #{tpu_custom_call.1} parent=1 // loop_header
      %s10 = sphi 0, %s14
      %p11 = scmp.ge.s32.totalorder %s10, 4
      %s17 = sphi 0, %s29
      %s18 = sphi 0, %s25
      %s19 = sphi 0, %s17
      %s20 = sphi 0, %s18
      %s21 = sphi 0, %s19
      %s22 = sphi 0, %s20
      %s34 = sphi 0, %s36
      %s37 = sphi 0, %s34
      %s38 = sphi 0, %s37
      %s54 = sphi 0, %s38
      %s62 = sphi 0, %s64
      %s65 = sphi 0, %s62
      %s66 = sphi 0, %s65
      %s82 = sphi 0, %s66
    $region4: #{tpu_custom_call.1} parent=1 // loop_header_branch
      %13 = sbr.rel (%p11) target = $region8
    $region5: #{tpu_custom_call.1} parent=1 // loop_body
      %s15 = ssub.s32 %s10, 1
      %s16 = ssub.s32 %s10, 2
      %s23 = sadd.s32 1, %s18
      %p24 = scmp.ge.s32.totalorder %s23, 2
      %s25 = scalar_select %p24, 0, %s23
      %s26 = sadd.s32 1, %s17
      %s27 = scalar_select %p24, %s26, %s17
      %p28 = scmp.ge.s32.totalorder %s27, 1
      %s29 = scalar_select %p28, 0, %s27
      %s30 = ssub.s32 %s18, %s25
      %s31 = ssub.s32 %s17, %s29
      %s32 = sor.u32 %s30, %s31
      %p33 = scmp.eq.s32.totalorder %s32, 0
      %s35 = sadd.s32 %s34, 1
      %s36 = scalar_select %p33, %s34, %s35
      %p39 = pneg %p33
      %p40 = scmp.eq.s32.totalorder %s10, 1
      %p41 = por %p39, %p40
      %p42 = scmp.ne.s32.totalorder %s34, %s37
      %p43 = scmp.eq.s32.totalorder %s10, 0
      %p44 = por %p42, %p43
      %p45 = scmp.ne.s32.totalorder %s34, %s37
      %p46 = scmp.eq.s32.totalorder %s15, 1
      %p47 = por %p45, %p46
      %p48 = scmp.ne.s32.totalorder %s37, %s38
      %p49 = scmp.eq.s32.totalorder %s15, 0
      %p50 = por %p48, %p49
      %p51 = scmp.ne.s32.totalorder %s37, %s38
      %p52 = scmp.eq.s32.totalorder %s16, 1
      %p53 = por %p51, %p52
      %p55 = scmp.ne.s32.totalorder %s38, %s54
      %p56 = scmp.eq.s32.totalorder %s16, 0
      %p57 = por %p55, %p56
      %s58 = ssub.s32 %s18, %s25
      %s59 = ssub.s32 %s17, %s29
      %s60 = sor.u32 %s58, %s59
      %p61 = scmp.eq.s32.totalorder %s60, 0
      %s63 = sadd.s32 %s62, 1
      %s64 = scalar_select %p61, %s62, %s63
      %p67 = pneg %p61
      %p68 = scmp.eq.s32.totalorder %s10, 1
      %p69 = por %p67, %p68
      %p70 = scmp.ne.s32.totalorder %s62, %s65
      %p71 = scmp.eq.s32.totalorder %s10, 0
      %p72 = por %p70, %p71
      %p73 = scmp.ne.s32.totalorder %s62, %s65
      %p74 = scmp.eq.s32.totalorder %s15, 1
      %p75 = por %p73, %p74
      %p76 = scmp.ne.s32.totalorder %s65, %s66
      %p77 = scmp.eq.s32.totalorder %s15, 0
      %p78 = por %p76, %p77
      %p79 = scmp.ne.s32.totalorder %s65, %s66
      %p80 = scmp.eq.s32.totalorder %s16, 1
      %p81 = por %p79, %p80
      %p83 = scmp.ne.s32.totalorder %s66, %s82
      %p84 = scmp.eq.s32.totalorder %s16, 0
      %p85 = por %p83, %p84
      %p86 = scmp.le.s32.totalorder 1, %s10
      %p87 = scmp.lt.s32.totalorder %s10, 3
      %p88 = pnand %p86, %p87
      %p89 = pneg %p88
      // Predicated region
      $region9: #{tpu_custom_call.1} parent=5 // pred_check
        _
      $region10: #{tpu_custom_call.1} parent=5 // pred_check_branch
        %91 = sbr.rel (%p88) target = $region12
      $region11: #{tpu_custom_call.1} parent=5 // pred_region
        %s92 = ssub.s32 %s10, 1
      $region12: #{tpu_custom_call.1} parent=5 // pred_fallthru
        _
      %p93 = scmp.lt.s32.totalorder %s10, 2
      // Predicated region
      $region13: #{tpu_custom_call.1} parent=5 // pred_check
        %p94 = pneg %p93
      $region14: #{tpu_custom_call.1} parent=5 // pred_check_branch
        %96 = sbr.rel (%p94) target = $region16
      $region15: #{tpu_custom_call.1} parent=5 // pred_region
        // Predicated region
        $region17: #{tpu_custom_call.1} parent=15 // pred_check
          %p97 = pneg %p44
        $region18: #{tpu_custom_call.1} parent=15 // pred_check_branch
          %99 = sbr.rel (%p97) target = $region20
        $region19: #{tpu_custom_call.1} parent=15 // pred_region
          %s100 = smul.u32 8, %s18
          %p101 = scmp.lt.s32.totalorder %s100, 15
          %s102 = scalar_select %p101, %s100, 15
          %p103 = scmp.lt.s32.totalorder %s17, 0
          %s104 = scalar_select %p103, %s17, 0
          %s105 = smul.addr %s102, 2
          %s106 = sadd.s32 %s104, %s105
          %s107 = smul.addr %s106, 8
          %s108 = scalar_lea.vmem %s0, %s107
          %s109 = smul.u32 8, %s18
        $region20: #{tpu_custom_call.1} parent=15 // pred_fallthru
          _
      $region16: #{tpu_custom_call.1} parent=5 // pred_fallthru
        _
      %p110 = scmp.le.s32.totalorder 1, %s10
      %p111 = scmp.lt.s32.totalorder %s10, 3
      %p112 = pnand %p110, %p111
      %p113 = pneg %p112
      // Predicated region
      $region21: #{tpu_custom_call.1} parent=5 // pred_check
        _
      $region22: #{tpu_custom_call.1} parent=5 // pred_check_branch
        %115 = sbr.rel (%p112) target = $region24
      $region23: #{tpu_custom_call.1} parent=5 // pred_region
        %s116 = ssub.s32 %s10, 1
        %s117 = smul.u32 8, %s20
        %p118 = scmp.lt.s32.totalorder %s117, 15
        %s119 = scalar_select %p118, %s117, 15
        %p120 = scmp.lt.s32.totalorder %s19, 0
        %s121 = scalar_select %p120, %s19, 0
        %s122 = smul.addr %s119, 2
        %s123 = sadd.s32 %s121, %s122
        %s124 = smul.addr %s123, 8
        %s125 = scalar_lea.vmem %s0, %s124
        %p126 = pneg %p50
        %p127 = pneg %p47
        %p128 = pneg %p78
        %p129 = pneg %p75
        %s130 = sand.u32 %s65, 1
        %s131 = scalar_lea.sflag [#allocation3], %s130
        %s132 = sand.u32 %s65, 1
        %s133 = smul.addr %s132, 32
        %s134 = scalar_lea.vmem [#allocation2], %s133
        %s135 = smul.u32 8, %s20
        %p136 = scmp.lt.s32.totalorder %s135, 15
        %s137 = scalar_select %p136, %s135, 15
        %p138 = scmp.lt.s32.totalorder %s19, 0
        %s139 = scalar_select %p138, %s19, 0
        %s140 = smul.addr %s137, 2
        %s141 = sadd.s32 %s139, %s140
        %s142 = smul.addr %s141, 8
        %s143 = scalar_lea.vmem %s0, %s142
        %s144 = smul.u32 8, %s20
        %s145 = smul.u32 4, %s20
        %v146 = vld [vmem:[%s143] sm:$0xff]
        %v147 = vld [vmem:[%s143 + $0x8] sm:$0xff]
        %v148 = vld [vmem:[%s143 + $0x10] sm:$0xff]
        %v149 = vld [vmem:[%s143 + $0x18] sm:$0xff]
        %v150 = vld [vmem:[%s143 + $0x20] sm:$0xff]
        %v151 = vld [vmem:[%s143 + $0x28] sm:$0xff]
        %v152 = vld [vmem:[%s143 + $0x30] sm:$0xff]
        %v153 = vld [vmem:[%s143 + $0x38] sm:$0xff]
        %v154 = vld [vmem:[%s143 + $0x40] sm:$0xff]
        %v155 = vld [vmem:[%s143 + $0x48] sm:$0xff]
        %v156 = vld [vmem:[%s143 + $0x50] sm:$0xff]
        %v157 = vld [vmem:[%s143 + $0x58] sm:$0xff]
        %v158 = vld [vmem:[%s143 + $0x60] sm:$0xff]
        %v159 = vld [vmem:[%s143 + $0x68] sm:$0xff]
        %v160 = vld [vmem:[%s143 + $0x70] sm:$0xff]
        %v161 = vld [vmem:[%s143 + $0x78] sm:$0xff]
        %v162 = vmax.f32 %v146, %v148
        %v163 = vmax.f32 %v147, %v149
        %v164 = vmax.f32 %v150, %v152
        %v165 = vmax.f32 %v151, %v153
        %v166 = vmax.f32 %v154, %v156
        %v167 = vmax.f32 %v155, %v157
        %v168 = vmax.f32 %v158, %v160
        %v169 = vmax.f32 %v159, %v161
        %v178 = vcombine.high %v162, %v162
        %v180 = vunpack.c.l.s4 1983009808
        %v181 = vunpack.c.0.s8 %v180
        %v182 = vlaneseq
        %v183 = vshrl.u32 %v182, 7
        %v184 = vsub.s32 %v181, %v183
        %v185 = vrot.slane %v162, %v184
        %v187 = vunpack.c.l.s4 1983009808
        %v188 = vunpack.c.0.s8 %v187
        %v189 = vlaneseq
        %v190 = vshrl.u32 %v189, 7
        %v191 = vsub.s32 %v188, %v190
        %v192 = vrot.slane %v178, %v191
        %v193 = vcombine.high %v185, %v185
        %v194 = vcombine.high %v192, %v192
        %v195 = vcombine.high %v163, %v163
        %v197 = vunpack.c.l.s4 1983009808
        %v198 = vunpack.c.0.s8 %v197
        %v199 = vlaneseq
        %v200 = vshrl.u32 %v199, 7
        %v201 = vsub.s32 %v198, %v200
        %v202 = vrot.slane %v163, %v201
        %v204 = vunpack.c.l.s4 1983009808
        %v205 = vunpack.c.0.s8 %v204
        %v206 = vlaneseq
        %v207 = vshrl.u32 %v206, 7
        %v208 = vsub.s32 %v205, %v207
        %v209 = vrot.slane %v195, %v208
        %v210 = vcombine.high %v202, %v202
        %v211 = vcombine.high %v209, %v209
        %v212 = vcombine.high %v164, %v164
        %v214 = vunpack.c.l.s4 1983009808
        %v215 = vunpack.c.0.s8 %v214
        %v216 = vlaneseq
        %v217 = vshrl.u32 %v216, 7
        %v218 = vsub.s32 %v215, %v217
        %v219 = vrot.slane %v164, %v218
        %v221 = vunpack.c.l.s4 1983009808
        %v222 = vunpack.c.0.s8 %v221
        %v223 = vlaneseq
        %v224 = vshrl.u32 %v223, 7
        %v225 = vsub.s32 %v222, %v224
        %v226 = vrot.slane %v212, %v225
        %v227 = vcombine.high %v219, %v219
        %v228 = vcombine.high %v226, %v226
        %v229 = vcombine.high %v165, %v165
        %v231 = vunpack.c.l.s4 1983009808
        %v232 = vunpack.c.0.s8 %v231
        %v233 = vlaneseq
        %v234 = vshrl.u32 %v233, 7
        %v235 = vsub.s32 %v232, %v234
        %v236 = vrot.slane %v165, %v235
        %v238 = vunpack.c.l.s4 1983009808
        %v239 = vunpack.c.0.s8 %v238
        %v240 = vlaneseq
        %v241 = vshrl.u32 %v240, 7
        %v242 = vsub.s32 %v239, %v241
        %v243 = vrot.slane %v229, %v242
        %v244 = vcombine.high %v236, %v236
        %v245 = vcombine.high %v243, %v243
        %v246 = vcombine.high %v166, %v166
        %v248 = vunpack.c.l.s4 1983009808
        %v249 = vunpack.c.0.s8 %v248
        %v250 = vlaneseq
        %v251 = vshrl.u32 %v250, 7
        %v252 = vsub.s32 %v249, %v251
        %v253 = vrot.slane %v166, %v252
        %v255 = vunpack.c.l.s4 1983009808
        %v256 = vunpack.c.0.s8 %v255
        %v257 = vlaneseq
        %v258 = vshrl.u32 %v257, 7
        %v259 = vsub.s32 %v256, %v258
        %v260 = vrot.slane %v246, %v259
        %v261 = vcombine.high %v253, %v253
        %v262 = vcombine.high %v260, %v260
        %v263 = vcombine.high %v167, %v167
        %v265 = vunpack.c.l.s4 1983009808
        %v266 = vunpack.c.0.s8 %v265
        %v267 = vlaneseq
        %v268 = vshrl.u32 %v267, 7
        %v269 = vsub.s32 %v266, %v268
        %v270 = vrot.slane %v167, %v269
        %v272 = vunpack.c.l.s4 1983009808
        %v273 = vunpack.c.0.s8 %v272
        %v274 = vlaneseq
        %v275 = vshrl.u32 %v274, 7
        %v276 = vsub.s32 %v273, %v275
        %v277 = vrot.slane %v263, %v276
        %v278 = vcombine.high %v270, %v270
        %v279 = vcombine.high %v277, %v277
        %v280 = vcombine.high %v168, %v168
        %v282 = vunpack.c.l.s4 1983009808
        %v283 = vunpack.c.0.s8 %v282
        %v284 = vlaneseq
        %v285 = vshrl.u32 %v284, 7
        %v286 = vsub.s32 %v283, %v285
        %v287 = vrot.slane %v168, %v286
        %v289 = vunpack.c.l.s4 1983009808
        %v290 = vunpack.c.0.s8 %v289
        %v291 = vlaneseq
        %v292 = vshrl.u32 %v291, 7
        %v293 = vsub.s32 %v290, %v292
        %v294 = vrot.slane %v280, %v293
        %v295 = vcombine.high %v287, %v287
        %v296 = vcombine.high %v294, %v294
        %v297 = vcombine.high %v169, %v169
        %v299 = vunpack.c.l.s4 1983009808
        %v300 = vunpack.c.0.s8 %v299
        %v301 = vlaneseq
        %v302 = vshrl.u32 %v301, 7
        %v303 = vsub.s32 %v300, %v302
        %v304 = vrot.slane %v169, %v303
        %v306 = vunpack.c.l.s4 1983009808
        %v307 = vunpack.c.0.s8 %v306
        %v308 = vlaneseq
        %v309 = vshrl.u32 %v308, 7
        %v310 = vsub.s32 %v307, %v309
        %v311 = vrot.slane %v297, %v310
        %v312 = vcombine.high %v304, %v304
        %v313 = vcombine.high %v311, %v311
        %v346 = vrot.slane %v185, 7
        %v347 = vrot.slane %v346, 2
        %v348 = vrot.slane %v193, 7
        %v349 = vrot.slane %v348, 2
        %v350 = vrot.slane %v192, 7
        %v351 = vrot.slane %v350, 2
        %v352 = vrot.slane %v194, 7
        %v353 = vrot.slane %v352, 2
        %v354 = vrot.slane %v202, 7
        %v355 = vrot.slane %v354, 2
        %v356 = vrot.slane %v210, 7
        %v357 = vrot.slane %v356, 2
        %v358 = vrot.slane %v209, 7
        %v359 = vrot.slane %v358, 2
        %v360 = vrot.slane %v211, 7
        %v361 = vrot.slane %v360, 2
        %v362 = vrot.slane %v219, 7
        %v363 = vrot.slane %v362, 2
        %v364 = vrot.slane %v227, 7
        %v365 = vrot.slane %v364, 2
        %v366 = vrot.slane %v226, 7
        %v367 = vrot.slane %v366, 2
        %v368 = vrot.slane %v228, 7
        %v369 = vrot.slane %v368, 2
        %v370 = vrot.slane %v236, 7
        %v371 = vrot.slane %v370, 2
        %v372 = vrot.slane %v244, 7
        %v373 = vrot.slane %v372, 2
        %v374 = vrot.slane %v243, 7
        %v375 = vrot.slane %v374, 2
        %v376 = vrot.slane %v245, 7
        %v377 = vrot.slane %v376, 2
        %v378 = vrot.slane %v253, 7
        %v379 = vrot.slane %v378, 2
        %v380 = vrot.slane %v261, 7
        %v381 = vrot.slane %v380, 2
        %v382 = vrot.slane %v260, 7
        %v383 = vrot.slane %v382, 2
        %v384 = vrot.slane %v262, 7
        %v385 = vrot.slane %v384, 2
        %v386 = vrot.slane %v270, 7
        %v387 = vrot.slane %v386, 2
        %v388 = vrot.slane %v278, 7
        %v389 = vrot.slane %v388, 2
        %v390 = vrot.slane %v277, 7
        %v391 = vrot.slane %v390, 2
        %v392 = vrot.slane %v279, 7
        %v393 = vrot.slane %v392, 2
        %v394 = vrot.slane %v287, 7
        %v395 = vrot.slane %v394, 2
        %v396 = vrot.slane %v295, 7
        %v397 = vrot.slane %v396, 2
        %v398 = vrot.slane %v294, 7
        %v399 = vrot.slane %v398, 2
        %v400 = vrot.slane %v296, 7
        %v401 = vrot.slane %v400, 2
        %v402 = vrot.slane %v304, 7
        %v403 = vrot.slane %v402, 2
        %v404 = vrot.slane %v312, 7
        %v405 = vrot.slane %v404, 2
        %v406 = vrot.slane %v311, 7
        %v407 = vrot.slane %v406, 2
        %v408 = vrot.slane %v313, 7
        %v409 = vrot.slane %v408, 2
        %v442 = vmax.f32 %v185, %v347
        %v443 = vmax.f32 %v193, %v349
        %v444 = vmax.f32 %v192, %v351
        %v445 = vmax.f32 %v194, %v353
        %v446 = vmax.f32 %v202, %v355
        %v447 = vmax.f32 %v210, %v357
        %v448 = vmax.f32 %v209, %v359
        %v449 = vmax.f32 %v211, %v361
        %v450 = vmax.f32 %v219, %v363
        %v451 = vmax.f32 %v227, %v365
        %v452 = vmax.f32 %v226, %v367
        %v453 = vmax.f32 %v228, %v369
        %v454 = vmax.f32 %v236, %v371
        %v455 = vmax.f32 %v244, %v373
        %v456 = vmax.f32 %v243, %v375
        %v457 = vmax.f32 %v245, %v377
        %v458 = vmax.f32 %v253, %v379
        %v459 = vmax.f32 %v261, %v381
        %v460 = vmax.f32 %v260, %v383
        %v461 = vmax.f32 %v262, %v385
        %v462 = vmax.f32 %v270, %v387
        %v463 = vmax.f32 %v278, %v389
        %v464 = vmax.f32 %v277, %v391
        %v465 = vmax.f32 %v279, %v393
        %v466 = vmax.f32 %v287, %v395
        %v467 = vmax.f32 %v295, %v397
        %v468 = vmax.f32 %v294, %v399
        %v469 = vmax.f32 %v296, %v401
        %v470 = vmax.f32 %v304, %v403
        %v471 = vmax.f32 %v312, %v405
        %v472 = vmax.f32 %v311, %v407
        %v473 = vmax.f32 %v313, %v409
        %v506 = vlaneseq
        %v507 = vshrl.u32 %v506, 7
        %v508 = vsub.s32 0, %v507
        %v509 = vrot.slane %v442, %v508
        %v510 = vlaneseq
        %v511 = vshrl.u32 %v510, 7
        %v512 = vsub.s32 0, %v511
        %v513 = vrot.slane %v443, %v512
        %v514 = vlaneseq
        %v515 = vshrl.u32 %v514, 7
        %v516 = vsub.s32 0, %v515
        %v517 = vrot.slane %v444, %v516
        %v518 = vlaneseq
        %v519 = vshrl.u32 %v518, 7
        %v520 = vsub.s32 0, %v519
        %v521 = vrot.slane %v445, %v520
        %v522 = vlaneseq
        %v523 = vshrl.u32 %v522, 7
        %v524 = vsub.s32 0, %v523
        %v525 = vrot.slane %v446, %v524
        %v526 = vlaneseq
        %v527 = vshrl.u32 %v526, 7
        %v528 = vsub.s32 0, %v527
        %v529 = vrot.slane %v447, %v528
        %v530 = vlaneseq
        %v531 = vshrl.u32 %v530, 7
        %v532 = vsub.s32 0, %v531
        %v533 = vrot.slane %v448, %v532
        %v534 = vlaneseq
        %v535 = vshrl.u32 %v534, 7
        %v536 = vsub.s32 0, %v535
        %v537 = vrot.slane %v449, %v536
        %v538 = vlaneseq
        %v539 = vshrl.u32 %v538, 7
        %v540 = vsub.s32 0, %v539
        %v541 = vrot.slane %v450, %v540
        %v542 = vlaneseq
        %v543 = vshrl.u32 %v542, 7
        %v544 = vsub.s32 0, %v543
        %v545 = vrot.slane %v451, %v544
        %v546 = vlaneseq
        %v547 = vshrl.u32 %v546, 7
        %v548 = vsub.s32 0, %v547
        %v549 = vrot.slane %v452, %v548
        %v550 = vlaneseq
        %v551 = vshrl.u32 %v550, 7
        %v552 = vsub.s32 0, %v551
        %v553 = vrot.slane %v453, %v552
        %v554 = vlaneseq
        %v555 = vshrl.u32 %v554, 7
        %v556 = vsub.s32 0, %v555
        %v557 = vrot.slane %v454, %v556
        %v558 = vlaneseq
        %v559 = vshrl.u32 %v558, 7
        %v560 = vsub.s32 0, %v559
        %v561 = vrot.slane %v455, %v560
        %v562 = vlaneseq
        %v563 = vshrl.u32 %v562, 7
        %v564 = vsub.s32 0, %v563
        %v565 = vrot.slane %v456, %v564
        %v566 = vlaneseq
        %v567 = vshrl.u32 %v566, 7
        %v568 = vsub.s32 0, %v567
        %v569 = vrot.slane %v457, %v568
        %v570 = vlaneseq
        %v571 = vshrl.u32 %v570, 7
        %v572 = vsub.s32 0, %v571
        %v573 = vrot.slane %v458, %v572
        %v574 = vlaneseq
        %v575 = vshrl.u32 %v574, 7
        %v576 = vsub.s32 0, %v575
        %v577 = vrot.slane %v459, %v576
        %v578 = vlaneseq
        %v579 = vshrl.u32 %v578, 7
        %v580 = vsub.s32 0, %v579
        %v581 = vrot.slane %v460, %v580
        %v582 = vlaneseq
        %v583 = vshrl.u32 %v582, 7
        %v584 = vsub.s32 0, %v583
        %v585 = vrot.slane %v461, %v584
        %v586 = vlaneseq
        %v587 = vshrl.u32 %v586, 7
        %v588 = vsub.s32 0, %v587
        %v589 = vrot.slane %v462, %v588
        %v590 = vlaneseq
        %v591 = vshrl.u32 %v590, 7
        %v592 = vsub.s32 0, %v591
        %v593 = vrot.slane %v463, %v592
        %v594 = vlaneseq
        %v595 = vshrl.u32 %v594, 7
        %v596 = vsub.s32 0, %v595
        %v597 = vrot.slane %v464, %v596
        %v598 = vlaneseq
        %v599 = vshrl.u32 %v598, 7
        %v600 = vsub.s32 0, %v599
        %v601 = vrot.slane %v465, %v600
        %v602 = vlaneseq
        %v603 = vshrl.u32 %v602, 7
        %v604 = vsub.s32 0, %v603
        %v605 = vrot.slane %v466, %v604
        %v606 = vlaneseq
        %v607 = vshrl.u32 %v606, 7
        %v608 = vsub.s32 0, %v607
        %v609 = vrot.slane %v467, %v608
        %v610 = vlaneseq
        %v611 = vshrl.u32 %v610, 7
        %v612 = vsub.s32 0, %v611
        %v613 = vrot.slane %v468, %v612
        %v614 = vlaneseq
        %v615 = vshrl.u32 %v614, 7
        %v616 = vsub.s32 0, %v615
        %v617 = vrot.slane %v469, %v616
        %v618 = vlaneseq
        %v619 = vshrl.u32 %v618, 7
        %v620 = vsub.s32 0, %v619
        %v621 = vrot.slane %v470, %v620
        %v622 = vlaneseq
        %v623 = vshrl.u32 %v622, 7
        %v624 = vsub.s32 0, %v623
        %v625 = vrot.slane %v471, %v624
        %v626 = vlaneseq
        %v627 = vshrl.u32 %v626, 7
        %v628 = vsub.s32 0, %v627
        %v629 = vrot.slane %v472, %v628
        %v630 = vlaneseq
        %v631 = vshrl.u32 %v630, 7
        %v632 = vsub.s32 0, %v631
        %v633 = vrot.slane %v473, %v632
        %vm634 = vcmask 1041409
        %v635 = vsel %vm634, %v513, %v509
        %vm636 = vcmask 1042434
        %v637 = vsel %vm636, %v517, %v635
        %vm638 = vcmask 1043459
        %v639 = vsel %vm638, %v521, %v637
        %vm640 = vcmask 1044484
        %v641 = vsel %vm640, %v525, %v639
        %vm642 = vcmask 1045509
        %v643 = vsel %vm642, %v529, %v641
        %vm644 = vcmask 1046534
        %v645 = vsel %vm644, %v533, %v643
        %vm646 = vcmask 1047559
        %v647 = vsel %vm646, %v537, %v645
        %v648 = vsel %vm634, %v545, %v541
        %v649 = vsel %vm636, %v549, %v648
        %v650 = vsel %vm638, %v553, %v649
        %v651 = vsel %vm640, %v557, %v650
        %v652 = vsel %vm642, %v561, %v651
        %v653 = vsel %vm644, %v565, %v652
        %v654 = vsel %vm646, %v569, %v653
        %v655 = vsel %vm634, %v577, %v573
        %v656 = vsel %vm636, %v581, %v655
        %v657 = vsel %vm638, %v585, %v656
        %v658 = vsel %vm640, %v589, %v657
        %v659 = vsel %vm642, %v593, %v658
        %v660 = vsel %vm644, %v597, %v659
        %v661 = vsel %vm646, %v601, %v660
        %v662 = vsel %vm634, %v609, %v605
        %v663 = vsel %vm636, %v613, %v662
        %v664 = vsel %vm638, %v617, %v663
        %v665 = vsel %vm640, %v621, %v664
        %v666 = vsel %vm642, %v625, %v665
        %v667 = vsel %vm644, %v629, %v666
        %v668 = vsel %vm646, %v633, %v667
        %vm673 = vcmask 64512
        %674 = vst.msk [vmem:[%s134] sm:$0xff] %vm673, %v647
        %675 = vst.msk [vmem:[%s134 + $0x8] sm:$0xff] %vm673, %v654
        %676 = vst.msk [vmem:[%s134 + $0x10] sm:$0xff] %vm673, %v661
        %677 = vst.msk [vmem:[%s134 + $0x18] sm:$0xff] %vm673, %v668
        %s678 = sand.u32 %s65, 1
        %s679 = scalar_lea.sflag [#allocation3], %s678
        %s680 = sand.u32 %s65, 1
        %s681 = smul.addr %s680, 32
        %s682 = scalar_lea.vmem [#allocation2], %s681
        // Predicated region
        $region25: #{tpu_custom_call.1} parent=23 // pred_check
          %p683 = pneg %p75
        $region26: #{tpu_custom_call.1} parent=23 // pred_check_branch
          %685 = sbr.rel (%p683) target = $region28
        $region27: #{tpu_custom_call.1} parent=23 // pred_region
          %s686 = smul.u32 4, %s20
          %s688 = ssub.s32 512, 512
          %689 = vsyncadd %s679, %s688
          %s690 = sadd.s32 %s19, %s686
          %s691 = smul.addr %s690, 128
          %s692 = scalar_lea.hbm %s1, %s691
          %s693 = sshll.u32 %s682, 4
          %s694 = int_to_ptr.vmem [resolvable:$true] %s693
          %699 = dma.vmem_to_hbm [thread:$0]  %s694, 512, %s692, %s679, 128, 128, 8
        $region28: #{tpu_custom_call.1} parent=23 // pred_fallthru
          _
      $region24: #{tpu_custom_call.1} parent=5 // pred_fallthru
        _
      %p700 = scmp.le.s32.totalorder 2, %s10
      // Predicated region
      $region29: #{tpu_custom_call.1} parent=5 // pred_check
        %p701 = pneg %p700
      $region30: #{tpu_custom_call.1} parent=5 // pred_check_branch
        %703 = sbr.rel (%p701) target = $region32
      $region31: #{tpu_custom_call.1} parent=5 // pred_region
        %s704 = ssub.s32 %s10, 2
        // Predicated region
        $region33: #{tpu_custom_call.1} parent=31 // pred_check
          %p705 = pneg %p81
        $region34: #{tpu_custom_call.1} parent=31 // pred_check_branch
          %707 = sbr.rel (%p705) target = $region36
        $region35: #{tpu_custom_call.1} parent=31 // pred_region
          %s708 = sand.u32 %s66, 1
          %s709 = scalar_lea.sflag [#allocation3], %s708
          %s710 = sand.u32 %s66, 1
          %s711 = smul.addr %s710, 32
          %s712 = scalar_lea.vmem [#allocation2], %s711
          %713 = dma.done %s709, 512
        $region36: #{tpu_custom_call.1} parent=31 // pred_fallthru
          _
      $region32: #{tpu_custom_call.1} parent=5 // pred_fallthru
        _
    $region6: #{tpu_custom_call.1} parent=1 // loop_footer
      %s14 = sadd.s32 1, %s10
    $region7: #{tpu_custom_call.1} parent=1 // loop_footer_branch
      %9 = sbr.rel target = $region3
    $region8: #{tpu_custom_call.1} parent=1 // loop_exit
      _
    %714 = vsyncpa [#allocation3], 1
    %s715 = scalar_lea.sflag [#allocation3], 1
    %716 = vsyncpa %s715, 1

</llo_original>
